<compile_context>
chip_gen: v7x
topology: tpu7x:2x2x1
jax: 0.10.0
libtpu: 0.0.40
codegen_flags: <defaults>
</compile_context>

<pallas_src>
import functools
import math

import jax
import jax.numpy as jnp
from jax.experimental import pallas as pl
from jax.experimental.pallas import tpu as pltpu


# ----------------------------------------------------------------------------
# Tiling helper: largest clean tile <= pref, else fall back to the full dim
# (full-extent blocks always satisfy the (8,128) constraint).
# ----------------------------------------------------------------------------
def _tile(full, pref):
    if full <= pref:
        return full
    if full % pref == 0:
        return pref
    return full


# ----------------------------------------------------------------------------
# Generic tiled matmul kernel: Y = epilogue(X @ W + b)
#   epilogue in {"none", "relu", "softmax"} (softmax => tn == N).
# ----------------------------------------------------------------------------
def _matmul_kernel(x_ref, w_ref, b_ref, o_ref, acc_ref, *, epilogue):
    k = pl.program_id(2)

    @pl.when(k == 0)
    def _():
        acc_ref[...] = jnp.zeros_like(acc_ref)

    acc_ref[...] += jnp.dot(x_ref[...], w_ref[...],
                            preferred_element_type=jnp.float32)

    @pl.when(k == pl.num_programs(2) - 1)
    def _():
        y = acc_ref[...] + b_ref[...]
        if epilogue == "relu":
            y = jnp.maximum(y, 0.0)
        elif epilogue == "softmax":
            y = y - jnp.max(y, axis=-1, keepdims=True)
            e = jnp.exp(y)
            # exact divide so probabilities sum to 1 to f32 precision
            y = e / jnp.sum(e, axis=-1, keepdims=True)
        o_ref[...] = y.astype(o_ref.dtype)


def pallas_linear(x, w, b, epilogue="none", out_dtype=jnp.float32,
                  tm_pref=256, tn_pref=512, tk_pref=512):
    """x:(M,K) @ w:(K,N) + b:(N,) with fused epilogue.  bf16 MXU inputs."""
    M, K = x.shape
    N = w.shape[1]
    x = x.astype(w.dtype)                      # bf16 matmul inputs
    tm = _tile(M, tm_pref)
    tk = _tile(K, tk_pref)
    tn = N if epilogue == "softmax" else _tile(N, tn_pref)
    grid = (M // tm, N // tn, K // tk)
    # NOTE: at realistic sizes keep 2*(x tile)+2*(w tile)+acc well under the
    # per-generation VMEM budget (v7x has only 64 MiB physical).
    return pl.pallas_call(
        functools.partial(_matmul_kernel, epilogue=epilogue),
        out_shape=jax.ShapeDtypeStruct((M, N), out_dtype),
        grid=grid,
        in_specs=[
            pl.BlockSpec((tm, tk), lambda i, j, k: (i, k)),
            pl.BlockSpec((tk, tn), lambda i, j, k: (k, j)),
            pl.BlockSpec((1, tn), lambda i, j, k: (0, j)),
        ],
        out_specs=pl.BlockSpec((tm, tn), lambda i, j, k: (i, j)),
        scratch_shapes=[pltpu.VMEM((tm, tn), jnp.float32)],
        compiler_params=pltpu.CompilerParams(
            dimension_semantics=("parallel", "parallel", "arbitrary")),
    )(x, w, b.reshape(1, N).astype(jnp.float32))


# ----------------------------------------------------------------------------
# Fused residual-add + LayerNorm (row-tiled, memory-bound -> one pass)
# ----------------------------------------------------------------------------
def _add_ln_kernel(x_ref, r_ref, g_ref, b_ref, o_ref):
    x = x_ref[...] + r_ref[...]
    mu = jnp.mean(x, axis=-1, keepdims=True)
    var = jnp.mean(jnp.square(x - mu), axis=-1, keepdims=True)
    xn = (x - mu) * jax.lax.rsqrt(var + 1e-5)
    o_ref[...] = (xn * g_ref[...] + b_ref[...]).astype(o_ref.dtype)


def pallas_add_layernorm(x2d, r2d, ln, tm_pref=256):
    M, D = x2d.shape
    tm = _tile(M, tm_pref)
    return pl.pallas_call(
        _add_ln_kernel,
        out_shape=jax.ShapeDtypeStruct((M, D), jnp.float32),
        grid=(M // tm,),
        in_specs=[
            pl.BlockSpec((tm, D), lambda i: (i, 0)),
            pl.BlockSpec((tm, D), lambda i: (i, 0)),
            pl.BlockSpec((1, D), lambda i: (0, 0)),
            pl.BlockSpec((1, D), lambda i: (0, 0)),
        ],
        out_specs=pl.BlockSpec((tm, D), lambda i: (i, 0)),
        compiler_params=pltpu.CompilerParams(
            dimension_semantics=("parallel",)),
    )(x2d, r2d, ln["g"].reshape(1, D), ln["b"].reshape(1, D))


# ----------------------------------------------------------------------------
# Scaled-dot-product attention per (batch*head).  No materialized mask:
# causal mask is generated in-kernel; no-mask cases skip the add entirely.
# ----------------------------------------------------------------------------
def _mha_kernel(q_ref, k_ref, v_ref, o_ref, *, scale, causal):
    q = q_ref[0]                                  # (Sq, Dh) bf16
    k = k_ref[0]                                  # (Sk, Dh) bf16
    v = v_ref[0]                                  # (Sk, Dh) bf16
    # Q @ K^T without an explicit transpose (MXU consumes the transposed rhs).
    s = jax.lax.dot_general(q, k, (((1,), (1,)), ((), ())),
                            preferred_element_type=jnp.float32) * scale
    if causal:
        Sq, Sk = s.shape
        qi = jax.lax.broadcasted_iota(jnp.int32, (Sq, Sk), 0)
        ki = jax.lax.broadcasted_iota(jnp.int32, (Sq, Sk), 1)
        s = jnp.where(qi >= ki, s, -1e30)
    s = s - jnp.max(s, axis=-1, keepdims=True)
    e = jnp.exp(s)
    p = e * pl.reciprocal(jnp.sum(e, axis=-1, keepdims=True), approx=True)
    o = jax.lax.dot_general(p.astype(v.dtype), v, (((1,), (0,)), ((), ())),
                            preferred_element_type=jnp.float32)
    o_ref[0] = o.astype(o_ref.dtype)


def pallas_mha(qh, kh, vh, scale, causal):
    BH, Sq, Dh = qh.shape
    Sk = kh.shape[1]
    return pl.pallas_call(
        functools.partial(_mha_kernel, scale=scale, causal=causal),
        out_shape=jax.ShapeDtypeStruct((BH, Sq, Dh), jnp.bfloat16),
        grid=(BH,),
        in_specs=[
            pl.BlockSpec((1, Sq, Dh), lambda i: (i, 0, 0)),
            pl.BlockSpec((1, Sk, Dh), lambda i: (i, 0, 0)),
            pl.BlockSpec((1, Sk, Dh), lambda i: (i, 0, 0)),
        ],
        out_specs=pl.BlockSpec((1, Sq, Dh), lambda i: (i, 0, 0)),
        compiler_params=pltpu.CompilerParams(
            dimension_semantics=("parallel",)),
    )(qh, kh, vh)


# ----------------------------------------------------------------------------
# Model glue (plain JAX around the Pallas kernels)
# ----------------------------------------------------------------------------
def mha(x_q, x_kv, p, n_heads, causal, self_attn):
    B, Sq, D = x_q.shape
    Sk = x_kv.shape[1]
    Dh = D // n_heads

    if self_attn:
        # fused QKV projection: one kernel launch, (D,3D) weight
        qkv = pallas_linear(x_q.reshape(B * Sq, D), p["wqkv"], p["bqkv"],
                            out_dtype=jnp.bfloat16)
        q = qkv[:, :D].reshape(B, Sq, D)
        k = qkv[:, D:2 * D].reshape(B, Sk, D)
        v = qkv[:, 2 * D:].reshape(B, Sk, D)
    else:
        q = pallas_linear(x_q.reshape(B * Sq, D), p["wq"], p["bq"],
                          out_dtype=jnp.bfloat16).reshape(B, Sq, D)
        kv = pallas_linear(x_kv.reshape(B * Sk, D), p["wkv"], p["bkv"],
                           out_dtype=jnp.bfloat16)
        k = kv[:, :D].reshape(B, Sk, D)
        v = kv[:, D:].reshape(B, Sk, D)

    qh = q.reshape(B, Sq, n_heads, Dh).transpose(0, 2, 1, 3).reshape(B * n_heads, Sq, Dh)
    kh = k.reshape(B, Sk, n_heads, Dh).transpose(0, 2, 1, 3).reshape(B * n_heads, Sk, Dh)
    vh = v.reshape(B, Sk, n_heads, Dh).transpose(0, 2, 1, 3).reshape(B * n_heads, Sk, Dh)

    oh = pallas_mha(qh, kh, vh, 1.0 / math.sqrt(Dh), causal)
    o = oh.reshape(B, n_heads, Sq, Dh).transpose(0, 2, 1, 3).reshape(B * Sq, D)
    return pallas_linear(o, p["wo"], p["bo"]).reshape(B, Sq, D)


def ffn(x, p):
    B, S, D = x.shape
    h = pallas_linear(x.reshape(B * S, D), p["w1"], p["b1"], epilogue="relu")
    return pallas_linear(h, p["w2"], p["b2"]).reshape(B, S, D)


def encoder_block(x, p, n_heads):
    B, S, D = x.shape
    a = mha(x, x, p["attn"], n_heads, causal=False, self_attn=True)
    x = pallas_add_layernorm(x.reshape(B * S, D), a.reshape(B * S, D),
                             p["ln1"]).reshape(B, S, D)
    f = ffn(x, p["ffn"])
    x = pallas_add_layernorm(x.reshape(B * S, D), f.reshape(B * S, D),
                             p["ln2"]).reshape(B, S, D)
    return x


def decoder_block(y, enc_out, p, n_heads):
    B, S, D = y.shape
    a = mha(y, y, p["self"], n_heads, causal=True, self_attn=True)
    y = pallas_add_layernorm(y.reshape(B * S, D), a.reshape(B * S, D),
                             p["ln1"]).reshape(B, S, D)
    c = mha(y, enc_out, p["cross"], n_heads, causal=False, self_attn=False)
    y = pallas_add_layernorm(y.reshape(B * S, D), c.reshape(B * S, D),
                             p["ln2"]).reshape(B, S, D)
    f = ffn(y, p["ffn"])
    y = pallas_add_layernorm(y.reshape(B * S, D), f.reshape(B * S, D),
                             p["ln3"]).reshape(B, S, D)
    return y


def sinusoidal_table(max_positions, d_model):
    pos = jnp.arange(max_positions, dtype=jnp.float32)[:, None]
    i = jnp.arange(d_model // 2, dtype=jnp.float32)[None, :]
    angle = pos / jnp.power(10000.0, 2.0 * i / d_model)
    pe = jnp.zeros((max_positions, d_model), jnp.float32)
    pe = pe.at[:, 0::2].set(jnp.sin(angle))
    pe = pe.at[:, 1::2].set(jnp.cos(angle))
    return pe


def transformer_forward(params, inputs, labels, n_heads,
                        input_mask=None, labels_mask=None):
    # dropout_ratio = 0.0 -> dropout is identity.
    # TODO(synk): padding masks (input_mask/labels_mask) are None in this run
    # and are not threaded into the attention kernels.
    B, Si = inputs.shape
    _, Sl = labels.shape
    D = params["emb"].shape[1]
    V = params["lm_w"].shape[1]

    in_e = jnp.take(params["emb"], inputs, axis=0) + params["pe"][None, :Si, :]
    lab_e = jnp.take(params["emb"], labels, axis=0) + params["pe"][None, :Sl, :]

    x = in_e
    for blk in params["enc"]:
        x = encoder_block(x, blk, n_heads)
    enc_out = x

    y = lab_e
    for blk in params["dec"]:
        y = decoder_block(y, enc_out, blk, n_heads)

    # fused LM head + softmax: logits never hit HBM
    probs = pallas_linear(y.reshape(B * Sl, D), params["lm_w"], params["lm_b"],
                          epilogue="softmax")
    return probs.reshape(B, Sl, V)


# ----------------------------------------------------------------------------
# Deterministic parameter init (shapes from the module __init__)
# ----------------------------------------------------------------------------
def _dense(key, shape, scale=0.02, dtype=jnp.bfloat16):
    return (scale * jax.random.normal(key, shape, dtype=jnp.float32)).astype(dtype)


def _init_self_attn(key, d):
    k1, k2 = jax.random.split(key)
    return {"wqkv": _dense(k1, (d, 3 * d)), "bqkv": jnp.zeros((3 * d,), jnp.float32),
            "wo": _dense(k2, (d, d)), "bo": jnp.zeros((d,), jnp.float32)}


def _init_cross_attn(key, d):
    k1, k2, k3 = jax.random.split(key, 3)
    return {"wq": _dense(k1, (d, d)), "bq": jnp.zeros((d,), jnp.float32),
            "wkv": _dense(k2, (d, 2 * d)), "bkv": jnp.zeros((2 * d,), jnp.float32),
            "wo": _dense(k3, (d, d)), "bo": jnp.zeros((d,), jnp.float32)}


def _init_ln(d):
    return {"g": jnp.ones((d,), jnp.float32), "b": jnp.zeros((d,), jnp.float32)}


def _init_ffn(key, d, d_ff):
    k1, k2 = jax.random.split(key)
    return {"w1": _dense(k1, (d, d_ff)), "b1": jnp.zeros((d_ff,), jnp.float32),
            "w2": _dense(k2, (d_ff, d)), "b2": jnp.zeros((d,), jnp.float32)}


def init_params(key, d_model, max_positions, n_enc, n_dec, vocab_size):
    d_ff = 4 * d_model
    keys = jax.random.split(key, 2 + 2 * n_enc + 3 * n_dec)
    ki = iter(keys)
    params = {
        "emb": _dense(next(ki), (vocab_size, d_model), dtype=jnp.float32),
        "pe": sinusoidal_table(max_positions, d_model),
        "enc": [],
        "dec": [],
    }
    for _ in range(n_enc):
        params["enc"].append({"attn": _init_self_attn(next(ki), d_model),
                              "ln1": _init_ln(d_model),
                              "ffn": _init_ffn(next(ki), d_model, d_ff),
                              "ln2": _init_ln(d_model)})
    for _ in range(n_dec):
        params["dec"].append({"self": _init_self_attn(next(ki), d_model),
                              "ln1": _init_ln(d_model),
                              "cross": _init_cross_attn(next(ki), d_model),
                              "ln2": _init_ln(d_model),
                              "ffn": _init_ffn(next(ki), d_model, d_ff),
                              "ln3": _init_ln(d_model)})
    params["lm_w"] = _dense(next(ki), (d_model, vocab_size))
    params["lm_b"] = jnp.zeros((vocab_size,), jnp.float32)
    return params


# ----------------------------------------------------------------------------
if __name__ == "__main__":
    B, S = 2, 8
    d_model, n_heads = 32, 4
    max_positions = 16
    vocab_size = 64
    n_enc, n_dec = 2, 2

    root = jax.random.PRNGKey(0)
    k_param, k_in, k_lab = jax.random.split(root, 3)
    params = init_params(k_param, d_model, max_positions, n_enc, n_dec, vocab_size)

    inputs = jax.random.randint(k_in, (B, S), 0, vocab_size, dtype=jnp.int32)
    labels = jax.random.randint(k_lab, (B, S), 0, vocab_size, dtype=jnp.int32)

    probs = transformer_forward(params, inputs, labels, n_heads,
                                input_mask=None, labels_mask=None)
    probs = jax.block_until_ready(probs)

    assert probs.shape == (B, S, vocab_size)
    row_sums = jnp.sum(probs, axis=-1)
    assert bool(jnp.all(jnp.abs(row_sums - 1.0) < 1e-4))
    assert bool(jnp.all(jnp.isfinite(probs)))
    print("KERNEL_OK")
</pallas_src>

<mosaic_0001>
module attributes {stable_mosaic.version = 11 : i64} {
  func.func @_matmul_kernel(%arg0: i32, %arg1: i32, %arg2: i32, %arg3: memref<16x32xbf16, #tpu.memory_space<vmem>>, %arg4: memref<32x96xbf16, #tpu.memory_space<vmem>>, %arg5: memref<1x96xf32, #tpu.memory_space<vmem>>, %arg6: memref<16x96xbf16, #tpu.memory_space<vmem>>, %arg7: memref<16x96xf32, #tpu.memory_space<vmem>>) attributes {dimension_semantics = [#tpu.dimension_semantics<parallel>, #tpu.dimension_semantics<parallel>, #tpu.dimension_semantics<arbitrary>], iteration_bounds = array<i64: 1, 1, 1>, scalar_prefetch = 0 : i64, scratch_operands = 1 : i64, tpu.core_type = #tpu.core_type<tc>, window_params = [{transform_indices = @transform_0, window_bounds = array<i64: 16, 32>}, {transform_indices = @transform_1, window_bounds = array<i64: 32, 96>}, {transform_indices = @transform_2, window_bounds = array<i64: 1, 96>}, {transform_indices = @transform_3, window_bounds = array<i64: 16, 96>}]} {
    %c0_i32 = arith.constant 0 : i32
    %0 = arith.cmpi eq, %arg2, %c0_i32 : i32
    %1 = arith.extui %0 : i1 to i32
    %c0_i32_0 = arith.constant 0 : i32
    %2 = arith.cmpi ne, %1, %c0_i32_0 : i32
    scf.if %2 {
      %cst_10 = arith.constant 0.000000e+00 : f32
      %12 = vector.broadcast %cst_10 : f32 to vector<16x96xf32>
      %c0_11 = arith.constant 0 : index
      %c0_12 = arith.constant 0 : index
      %13 = vector.load %arg7[%c0_11, %c0_12] : memref<16x96xf32, #tpu.memory_space<vmem>>, vector<16x96xf32>
      tpu.vector_store %arg7[%c0_11, %c0_12], %12 {strides = array<i32>} : memref<16x96xf32, #tpu.memory_space<vmem>>, vector<16x96xf32>,
    } else {
    }
    %c0 = arith.constant 0 : index
    %c0_1 = arith.constant 0 : index
    %3 = vector.load %arg7[%c0, %c0_1] : memref<16x96xf32, #tpu.memory_space<vmem>>, vector<16x96xf32>
    %c0_2 = arith.constant 0 : index
    %c0_3 = arith.constant 0 : index
    %4 = vector.load %arg3[%c0_2, %c0_3] : memref<16x32xbf16, #tpu.memory_space<vmem>>, vector<16x32xbf16>
    %c0_4 = arith.constant 0 : index
    %c0_5 = arith.constant 0 : index
    %5 = vector.load %arg4[%c0_4, %c0_5] : memref<32x96xbf16, #tpu.memory_space<vmem>>, vector<32x96xbf16>
    %cst = arith.constant dense<0.000000e+00> : vector<16x96xf32>
    %6 = tpu.matmul %4, %5, %cst {dimension_numbers = #tpu.dot_dimension_numbers<[1], [0], [0], [1], [0, 0, 1, 1], [], []>} : vector<16x32xbf16>, vector<32x96xbf16>, vector<16x96xf32> -> vector<16x96xf32>
    %7 = arith.addf %3, %6 : vector<16x96xf32>
    %c0_6 = arith.constant 0 : index
    %c0_7 = arith.constant 0 : index
    %8 = vector.load %arg7[%c0_6, %c0_7] : memref<16x96xf32, #tpu.memory_space<vmem>>, vector<16x96xf32>
    tpu.vector_store %arg7[%c0_6, %c0_7], %7 {strides = array<i32>} : memref<16x96xf32, #tpu.memory_space<vmem>>, vector<16x96xf32>,
    %c0_i32_8 = arith.constant 0 : i32
    %9 = arith.cmpi eq, %arg2, %c0_i32_8 : i32
    %10 = arith.extui %9 : i1 to i32
    %c0_i32_9 = arith.constant 0 : i32
    %11 = arith.cmpi ne, %10, %c0_i32_9 : i32
    scf.if %11 {
      %c0_10 = arith.constant 0 : index
      %c0_11 = arith.constant 0 : index
      %12 = vector.load %arg7[%c0_10, %c0_11] : memref<16x96xf32, #tpu.memory_space<vmem>>, vector<16x96xf32>
      %c0_12 = arith.constant 0 : index
      %c0_13 = arith.constant 0 : index
      %13 = vector.load %arg5[%c0_12, %c0_13] : memref<1x96xf32, #tpu.memory_space<vmem>>, vector<1x96xf32>
      %14 = vector.broadcast %13 : vector<1x96xf32> to vector<16x96xf32>
      %15 = arith.addf %12, %14 : vector<16x96xf32>
      %16 = arith.truncf %15 : vector<16x96xf32> to vector<16x96xbf16>
      %c0_14 = arith.constant 0 : index
      %c0_15 = arith.constant 0 : index
      %17 = vector.load %arg6[%c0_14, %c0_15] : memref<16x96xbf16, #tpu.memory_space<vmem>>, vector<16x96xbf16>
      tpu.vector_store %arg6[%c0_14, %c0_15], %16 {strides = array<i32>} : memref<16x96xbf16, #tpu.memory_space<vmem>>, vector<16x96xbf16>,
    } else {
    }
    return
  }
  func.func @transform_0(%arg0: i32, %arg1: i32, %arg2: i32) -> (i32, i32) {
    %c0_i32 = arith.constant 0 : i32
    return %arg0, %arg2 : i32, i32
  }
  func.func @transform_1(%arg0: i32, %arg1: i32, %arg2: i32) -> (i32, i32) {
    %c0_i32 = arith.constant 0 : i32
    return %arg2, %arg1 : i32, i32
  }
  func.func @transform_2(%arg0: i32, %arg1: i32, %arg2: i32) -> (i32, i32) {
    %c0_i32 = arith.constant 0 : i32
    %c0_i32_0 = arith.constant 0 : i32
    return %c0_i32, %arg1 : i32, i32
  }
  func.func @transform_3(%arg0: i32, %arg1: i32, %arg2: i32) -> (i32, i32) {
    %c0_i32 = arith.constant 0 : i32
    return %arg0, %arg1 : i32, i32
  }
}

</mosaic_0001>

<llo_original>
// kernel: tpu_custom_call.1
$region0: #{tpu_custom_call.1}
  #allocation0 [shape = 'u32[]', space=smem, size = 0x4, offset = 0x4, fixed_abs, tag = 'smem constant byte address 0x4 - core index']
  #allocation1 [shape = 'u32[144,128]{1,0:T(1,128)}', space=vmem, size = 0x12000, scoped, tag = 'internal scratch']
  #allocation2 [shape = 'f32[16,96]{1,0:T(8,128)}', space=vmem, size = 0x2000, scoped, tag = 'scratch operand']
  %s0 = inlined_call_operand.hbm [shape: bf16[16,32], index: 0, kind: input, shape index: {}]
  %s1 = inlined_call_operand.hbm [shape: bf16[32,96], index: 1, kind: input, shape index: {}]
  %s2 = inlined_call_operand.vmem [shape: f32[1,96], index: 2, kind: input, shape index: {}]
  %s3 = inlined_call_operand.hbm [shape: bf16[16,96], index: 3, kind: output, shape index: {}]
  %s4 = sld [smem:[#allocation0]]
  $region38: #{tpu_custom_call.1} parent=0
    _
  %s6 = ssub.s32 1, %s4
  %s7 = scalar_select 0, %s6, %s4
  $region1: #{tpu_custom_call.1} parent=0
    #allocation3 [shape = 'u8[4096]{0}', space=vmem, size = 0x1000, scoped, tag = 'input window, operand 0, single buffered']
    #allocation4 [shape = 's32[1]{0}', space=sflag, size = 0x4, scoped, tag = 'scoped memory for tpu_custom_call.1']
    #allocation5 [shape = 's32[1]{0}', space=sflag, size = 0x4, scoped, tag = 'scoped memory for tpu_custom_call.1']
    #allocation6 [shape = 'u8[8192]{0}', space=vmem, size = 0x2000, scoped, tag = 'input window, operand 1, single buffered']
    #allocation7 [shape = 's32[1]{0}', space=sflag, size = 0x4, scoped, tag = 'scoped memory for tpu_custom_call.1']
    #allocation8 [shape = 'u8[4096]{0}', space=vmem, size = 0x1000, scoped, tag = 'output window, operand 0, single buffered']
    %8 = vsyncpa [#allocation4], 0
    %9 = vsyncpa [#allocation7], 0
    %10 = vsyncpa [#allocation5], 0
    // Predicated region
    $region2: #{tpu_custom_call.1} parent=1 // pred_check
      _
    $region3: #{tpu_custom_call.1} parent=1 // pred_check_branch
      %12 = sbr.rel (0) target = $region5
    $region4: #{tpu_custom_call.1} parent=1 // pred_region
      %s14 = ssub.s32 128, 128
      %15 = vsyncadd [#allocation4], %s14
      %s16 = sshll.u32 [#allocation3], 4
      %s17 = int_to_ptr.vmem [resolvable:$true] %s16
      %22 = dma.hbm_to_vmem [thread:$0]  %s0, 128, %s17, [#allocation4], 64, 64, 4
    $region5: #{tpu_custom_call.1} parent=1 // pred_fallthru
      _
    // Predicated region
    $region6: #{tpu_custom_call.1} parent=1 // pred_check
      _
    $region7: #{tpu_custom_call.1} parent=1 // pred_check_branch
      %24 = sbr.rel (0) target = $region9
    $region8: #{tpu_custom_call.1} parent=1 // pred_region
      %s26 = ssub.s32 256, 256
      %27 = vsyncadd [#allocation7], %s26
      %s28 = sshll.u32 [#allocation6], 4
      %s29 = int_to_ptr.vmem [resolvable:$true] %s28
      %34 = dma.hbm_to_vmem [thread:$0]  %s1, 256, %s29, [#allocation7], 64, 64, 4
    $region9: #{tpu_custom_call.1} parent=1 // pred_fallthru
      _
    // Predicated region
    $region10: #{tpu_custom_call.1} parent=1 // pred_check
      _
    $region11: #{tpu_custom_call.1} parent=1 // pred_check_branch
      %36 = sbr.rel (0) target = $region13
    $region12: #{tpu_custom_call.1} parent=1 // pred_region
      _
    $region13: #{tpu_custom_call.1} parent=1 // pred_fallthru
      _
    // Predicated region
    $region14: #{tpu_custom_call.1} parent=1 // pred_check
      _
    $region15: #{tpu_custom_call.1} parent=1 // pred_check_branch
      %38 = sbr.rel (0) target = $region17
    $region16: #{tpu_custom_call.1} parent=1 // pred_region
      %39 = dma.done [#allocation4], 128
    $region17: #{tpu_custom_call.1} parent=1 // pred_fallthru
      _
    // Predicated region
    $region18: #{tpu_custom_call.1} parent=1 // pred_check
      _
    $region19: #{tpu_custom_call.1} parent=1 // pred_check_branch
      %41 = sbr.rel (0) target = $region21
    $region20: #{tpu_custom_call.1} parent=1 // pred_region
      %42 = dma.done [#allocation7], 256
    $region21: #{tpu_custom_call.1} parent=1 // pred_fallthru
      _
    %p44 = scmp.eq.s32.totalorder 0, 0
    // Predicated region
    $region22: #{tpu_custom_call.1} parent=1 // pred_check
      %p45 = pneg %p44
    $region23: #{tpu_custom_call.1} parent=1 // pred_check_branch
      %47 = sbr.rel (%p45) target = $region25
    $region24: #{tpu_custom_call.1} parent=1 // pred_region
      %vm48 = vcmask 785408
      %49 = vst.msk [vmem:[#allocation2] sm:$0xff] %vm48, 0.0
      %50 = vst.msk [vmem:[#allocation2 + $0x8] sm:$0xff] %vm48, 0.0
    $region25: #{tpu_custom_call.1} parent=1 // pred_fallthru
      _
    %v51 = vld [vmem:[#allocation2] sm:$0xff]
    %v52 = vld [vmem:[#allocation2 + $0x8] sm:$0xff]
    %v53 = vld [vmem:[#allocation3] sm:$0xf]
    %v54 = vld [vmem:[#allocation3 + $0x4] sm:$0xf]
    %v55 = vld [vmem:[#allocation6] sm:$0xf]
    %v56 = vld [vmem:[#allocation6 + $0x4] sm:$0xf]
    %v57 = vld [vmem:[#allocation6 + $0x8] sm:$0xf]
    %v58 = vld [vmem:[#allocation6 + $0xc] sm:$0xf]
    %v61 = vunpack.c.l.b16 %v53
    %v62 = vunpack.c.l.b16 %v54
    %v63 = vpack.c.b16 %v62, %v61
    %v68 = vunpack.c.l.b16 %v55
    %v69 = vunpack.c.l.b16 %v56
    %v70 = vunpack.c.l.b16 %v57
    %v71 = vunpack.c.l.b16 %v58
    %v72 = vpack.c.b16 %v69, %v68
    %v73 = vpack.c.b16 %v71, %v70
    %vm76 = vcmask 261120
    %v78 = vsel %vm76, %v63, 0
    %80 = vmatprep.subr.bf16.mxu0 0
    %81 = vmatpush1.bf16.msra.mxu0 %v72
    %82 = vmatprep.subr.bf16.mxu0 0
    %83 = vmatpush1.bf16.msra.mxu0 %v73
    %84 = vmatprep.subr.bf16.mxu0 0
    %85 = vmatpush1.bf16.msra.mxu0 0
    %86 = vmatprep.subr.bf16.mxu0 0
    %87 = vmatpush1.bf16.msra.mxu0 0
    %88 = vmatprep.subr.bf16.mxu0 0
    %89 = vmatpush1.bf16.msra.mxu0 0
    %90 = vmatprep.subr.bf16.mxu0 0
    %91 = vmatpush1.bf16.msra.mxu0 0
    %92 = vmatprep.subr.bf16.mxu0 0
    %93 = vmatpush1.bf16.msra.mxu0 0
    %94 = vmatprep.subr.bf16.mxu0 0
    %95 = vmatpush1.bf16.msra.mxu0 0
    %96 = vmatprep.subr.bf16.mxu0 0
    %97 = vmatpush1.bf16.msra.mxu0 0
    %98 = vmatprep.subr.bf16.mxu0 0
    %99 = vmatpush1.bf16.msra.mxu0 0
    %100 = vmatprep.subr.bf16.mxu0 0
    %101 = vmatpush1.bf16.msra.mxu0 0
    %102 = vmatprep.subr.bf16.mxu0 0
    %103 = vmatpush1.bf16.msra.mxu0 0
    %104 = vmatprep.subr.bf16.mxu0 0
    %105 = vmatpush1.bf16.msra.mxu0 0
    %106 = vmatprep.subr.bf16.mxu0 0
    %107 = vmatpush1.bf16.msra.mxu0 0
    %108 = vmatprep.subr.bf16.mxu0 0
    %109 = vmatpush1.bf16.msra.mxu0 0
    %110 = vmatprep.subr.bf16.mxu0 0
    %111 = vmatpush1.bf16.msra.mxu0 0
    %112 = vmatprep.mubr.bf16.mxu0 0
    %113 = vmatmul.mubr.bf16.gmra.mrb[0].mxu0 %v78
    %v114 = vpop.f32.mrb[0].mxu0
    %v115 = vadd.f32 0.0, %v114
    %v116 = vpop.f32.mrb[0].mxu0
    %v117 = vpop.f32.mrb[0].mxu0
    %v118 = vadd.f32 0.0, %v117
    %v119 = vpop.f32.mrb[0].mxu0
    %120 = vdwg.mxu0
    %v121 = vadd.f32 %v51, %v115
    %v122 = vadd.f32 %v52, %v118
    %vm123 = vcmask 785408
    %124 = vst.msk [vmem:[#allocation2] sm:$0xff] %vm123, %v121
    %125 = vst.msk [vmem:[#allocation2 + $0x8] sm:$0xff] %vm123, %v122
    // Predicated region
    $region26: #{tpu_custom_call.1} parent=1 // pred_check
      %p126 = pneg %p44
    $region27: #{tpu_custom_call.1} parent=1 // pred_check_branch
      %128 = sbr.rel (%p126) target = $region29
    $region28: #{tpu_custom_call.1} parent=1 // pred_region
      %v129 = vld [vmem:[#allocation2] sm:$0xff]
      %v130 = vld [vmem:[#allocation2 + $0x8] sm:$0xff]
      %v131 = vld [vmem:[%s2] sm:$0x1]
      %v133 = vlaneseq
      %v134 = vshrl.u32 %v133, 7
      %v135 = vsub.s32 0, %v134
      %v136 = vrot.slane %v131, %v135
      %v138 = vadd.f32 %v129, %v136
      %v139 = vadd.f32 %v130, %v136
      %v140 = vpack.c.bf16 %v139, %v138
      %v142 = vunpack.c.l.b16 %v140
      %v143 = vunpack.c.h.b16 %v140
      %v144 = vpack.c.b16 %v142, %v142
      %v145 = vpack.c.b16 %v143, %v143
      %vm148 = vcmask 781312
      %149 = vst.msk [vmem:[#allocation8] sm:$0xf] %vm148, %v144
      %150 = vst.msk [vmem:[#allocation8 + $0x4] sm:$0xf] %vm148, %v145
    $region29: #{tpu_custom_call.1} parent=1 // pred_fallthru
      _
    // Predicated region
    $region30: #{tpu_custom_call.1} parent=1 // pred_check
      _
    $region31: #{tpu_custom_call.1} parent=1 // pred_check_branch
      %152 = sbr.rel (0) target = $region33
    $region32: #{tpu_custom_call.1} parent=1 // pred_region
      %s154 = ssub.s32 128, 128
      %155 = vsyncadd [#allocation5], %s154
      %s156 = sshll.u32 [#allocation8], 4
      %s157 = int_to_ptr.vmem [resolvable:$true] %s156
      %162 = dma.vmem_to_hbm [thread:$0]  %s157, 128, %s3, [#allocation5], 64, 64, 4
    $region33: #{tpu_custom_call.1} parent=1 // pred_fallthru
      _
    // Predicated region
    $region34: #{tpu_custom_call.1} parent=1 // pred_check
      _
    $region35: #{tpu_custom_call.1} parent=1 // pred_check_branch
      %164 = sbr.rel (0) target = $region37
    $region36: #{tpu_custom_call.1} parent=1 // pred_region
      %165 = dma.done [#allocation5], 128
    $region37: #{tpu_custom_call.1} parent=1 // pred_fallthru
      _
    %166 = vsyncpa [#allocation4], 1
    %167 = vsyncpa [#allocation7], 1
    %168 = vsyncpa [#allocation5], 1

</llo_original>
